<compile_context>
chip_gen: v7x
topology: tpu7x:2x2x1
jax: 0.10.0
libtpu: 0.0.40
codegen_flags: <defaults>
</compile_context>

<pallas_src>
import functools

import jax
import jax.numpy as jnp
from jax.experimental import pallas as pl
from jax.experimental.pallas import tpu as pltpu


def _pick_tile(dim, unit, target):
    """Largest legal tile size <= target.

    Legal sizes: the full `dim` (always legal for a BlockSpec), or a divisor
    of `dim` that is a multiple of `unit` (the TPU (8,128) constraint on the
    last two block dims).
    """
    if dim <= target:
        return dim
    best = None
    t = unit
    while t <= target:
        if dim % t == 0:
            best = t
        t += unit
    return best if best is not None else dim


def _add_kernel(x_ref, emb_ref, o_ref):
    # x_ref: (TB, TC), emb_ref: (1, TC) -> broadcast over rows.
    o_ref[...] = (x_ref[...] + emb_ref[...]).astype(o_ref.dtype)


def _add_dropout_kernel(x_ref, emb_ref, bits_ref, o_ref, *, threshold, scale):
    y = x_ref[...] + emb_ref[...]
    # Integer-threshold dropout: P(keep) = (2^32 - threshold) / 2^32 = 1 - p.
    keep = bits_ref[...] >= jnp.uint32(threshold)
    y = jnp.where(keep, y * jnp.asarray(scale, dtype=y.dtype), jnp.zeros_like(y))
    o_ref[...] = y.astype(o_ref.dtype)


def absolute_position_embedding(x, embedding, *, p=0.1, training=False, rng_key=None):
    """out = Dropout(x + embedding); x: (B, S, D), embedding: (1, S, D)."""
    B, S, D = x.shape
    assert embedding.shape == (1, S, D), "embedding must be (1, n_token, d_embed)"

    # Lane-dense layout: fold (S, D) into one trailing axis so the output
    # block's last dim is a large multiple of 128 even for small d_embed.
    C = S * D
    x2 = x.reshape(B, C)
    emb2 = embedding.reshape(1, C)

    # Column tile: multiple of 128, capped at 16K elems (64 KiB/row f32).
    TC = _pick_tile(C, 128, 16 * 1024)
    # Row tile: multiple of 8 (or full B), keep the x tile around <= 2 MiB so
    # inputs + output + mask, double-buffered, stay far below scoped VMEM.
    bytes_per_elem = x.dtype.itemsize
    max_rows = max(1, (2 * 1024 * 1024) // (bytes_per_elem * TC))
    TB = _pick_tile(B, 8, max_rows)

    # Columns outer, batch inner: the embedding block index only depends on
    # the outer axis, so the emb tile stays resident across the inner loop.
    grid = (C // TC, B // TB)

    x_spec = pl.BlockSpec((TB, TC), lambda c, b: (b, c))
    emb_spec = pl.BlockSpec((1, TC), lambda c, b: (0, c))
    out_spec = pl.BlockSpec((TB, TC), lambda c, b: (b, c))
    out_shape = jax.ShapeDtypeStruct((B, C), x.dtype)
    cparams = pltpu.CompilerParams(dimension_semantics=("parallel", "parallel"))

    use_dropout = bool(training) and float(p) > 0.0
    if use_dropout and float(p) >= 1.0:
        return jnp.zeros_like(x)

    if not use_dropout:
        out2 = pl.pallas_call(
            _add_kernel,
            out_shape=out_shape,
            grid_spec=pltpu.PrefetchScalarGridSpec(
                num_scalar_prefetch=0,
                grid=grid,
                in_specs=[x_spec, emb_spec],
                out_specs=out_spec,
            ),
            compiler_params=cparams,
        )(x2, emb2)
    else:
        if rng_key is None:
            rng_key = jax.random.PRNGKey(0)
        # Mask bits drawn outside the kernel (TPU hardware PRNG primitives
        # have no interpret/CPU lowering); compare + select + scale fused in.
        # TODO(synk): exact torch.nn.Dropout RNG bit-reproduction is not possible.
        bits = jax.random.bits(rng_key, (B, C), dtype=jnp.uint32)
        threshold = min(int(round(float(p) * 2.0 ** 32)), 2 ** 32 - 1)
        scale = 1.0 / (1.0 - float(p))
        kernel = functools.partial(_add_dropout_kernel, threshold=threshold, scale=scale)
        out2 = pl.pallas_call(
            kernel,
            out_shape=out_shape,
            grid_spec=pltpu.PrefetchScalarGridSpec(
                num_scalar_prefetch=0,
                grid=grid,
                in_specs=[x_spec, emb_spec, x_spec],  # bits tiled exactly like x
                out_specs=out_spec,
            ),
            compiler_params=cparams,
        )(x2, emb2, bits)

    return out2.reshape(B, S, D)


if __name__ == "__main__":
    # Small shapes consistent with the module: batch=2, seq=8, hidden=32.
    B, S, D = 2, 8, 32
    p = 0.1

    key = jax.random.PRNGKey(0)
    kx, ke, kd = jax.random.split(key, 3)

    x = jax.random.normal(kx, (B, S, D), dtype=jnp.float32)
    # trunc_normal_(std=0.02)
    embedding = (jax.random.truncated_normal(ke, -2.0, 2.0, (1, S, D), jnp.float32)
                 * jnp.float32(0.02))

    # Eval mode (dropout is identity) — deterministic, verify against reference.
    out_eval = jax.block_until_ready(
        absolute_position_embedding(x, embedding, p=p, training=False))
    ref = x + embedding
    assert out_eval.shape == (B, S, D)
    assert jnp.allclose(out_eval, ref, atol=1e-6), "eval-mode mismatch"

    # Training mode (dropout active). Kept elements must equal (x+emb)/(1-p).
    out_train = jax.block_until_ready(
        absolute_position_embedding(x, embedding, p=p, training=True, rng_key=kd))
    assert out_train.shape == (B, S, D)
    scaled = ref / (1.0 - p)
    ok = jnp.where(out_train != 0, jnp.abs(out_train - scaled) < 1e-5, True)
    assert bool(jnp.all(ok)), "training-mode kept-element mismatch"

    print("KERNEL_OK")
</pallas_src>

<mosaic_0001>
module attributes {stable_mosaic.version = 11 : i64} {
  func.func @_add_kernel(%arg0: i32, %arg1: i32, %arg2: memref<2x256xf32, #tpu.memory_space<vmem>>, %arg3: memref<1x256xf32, #tpu.memory_space<vmem>>, %arg4: memref<2x256xf32, #tpu.memory_space<vmem>>) attributes {dimension_semantics = [#tpu.dimension_semantics<parallel>, #tpu.dimension_semantics<parallel>], iteration_bounds = array<i64: 1, 1>, scalar_prefetch = 0 : i64, scratch_operands = 0 : i64, tpu.core_type = #tpu.core_type<tc>, window_params = [{transform_indices = @transform_0, window_bounds = array<i64: 2, 256>}, {transform_indices = @transform_1, window_bounds = array<i64: 1, 256>}, {transform_indices = @transform_2, window_bounds = array<i64: 2, 256>}]} {
    %c0 = arith.constant 0 : index
    %c0_0 = arith.constant 0 : index
    %0 = vector.load %arg2[%c0, %c0_0] : memref<2x256xf32, #tpu.memory_space<vmem>>, vector<2x256xf32>
    %c0_1 = arith.constant 0 : index
    %c0_2 = arith.constant 0 : index
    %1 = vector.load %arg3[%c0_1, %c0_2] : memref<1x256xf32, #tpu.memory_space<vmem>>, vector<1x256xf32>
    %2 = vector.broadcast %1 : vector<1x256xf32> to vector<2x256xf32>
    %3 = arith.addf %0, %2 : vector<2x256xf32>
    %c0_3 = arith.constant 0 : index
    %c0_4 = arith.constant 0 : index
    %4 = vector.load %arg4[%c0_3, %c0_4] : memref<2x256xf32, #tpu.memory_space<vmem>>, vector<2x256xf32>
    tpu.vector_store %arg4[%c0_3, %c0_4], %3 {strides = array<i32>} : memref<2x256xf32, #tpu.memory_space<vmem>>, vector<2x256xf32>,
    return
  }
  func.func @transform_0(%arg0: i32, %arg1: i32) -> (i32, i32) {
    %c0_i32 = arith.constant 0 : i32
    return %arg1, %arg0 : i32, i32
  }
  func.func @transform_1(%arg0: i32, %arg1: i32) -> (i32, i32) {
    %c0_i32 = arith.constant 0 : i32
    %c0_i32_0 = arith.constant 0 : i32
    return %c0_i32, %arg0 : i32, i32
  }
  func.func @transform_2(%arg0: i32, %arg1: i32) -> (i32, i32) {
    %c0_i32 = arith.constant 0 : i32
    return %arg1, %arg0 : i32, i32
  }
}

</mosaic_0001>

<llo_original>
// kernel: tpu_custom_call.1
$region0: #{tpu_custom_call.1}
  #allocation0 [shape = 'u32[]', space=smem, size = 0x4, offset = 0x4, fixed_abs, tag = 'smem constant byte address 0x4 - core index']
  #allocation1 [shape = 'u32[144,128]{1,0:T(1,128)}', space=vmem, size = 0x12000, scoped, tag = 'internal scratch']
  %s0 = inlined_call_operand.hbm [shape: f32[2,256], index: 0, kind: input, shape index: {}]
  %s1 = inlined_call_operand.vmem [shape: f32[1,256], index: 1, kind: input, shape index: {}]
  %s2 = inlined_call_operand.hbm [shape: f32[2,256], index: 2, kind: output, shape index: {}]
  %s3 = sld [smem:[#allocation0]]
  $region22: #{tpu_custom_call.1} parent=0
    _
  %s5 = ssub.s32 1, %s3
  %s6 = scalar_select 0, %s5, %s3
  $region1: #{tpu_custom_call.1} parent=0
    #allocation2 [shape = 'u8[2048]{0}', space=vmem, size = 0x800, scoped, tag = 'input window, operand 0, single buffered']
    #allocation3 [shape = 's32[1]{0}', space=sflag, size = 0x4, scoped, tag = 'scoped memory for tpu_custom_call.1']
    #allocation4 [shape = 's32[1]{0}', space=sflag, size = 0x4, scoped, tag = 'scoped memory for tpu_custom_call.1']
    #allocation5 [shape = 'u8[2048]{0}', space=vmem, size = 0x800, scoped, tag = 'output window, operand 0, single buffered']
    %7 = vsyncpa [#allocation3], 0
    %8 = vsyncpa [#allocation4], 0
    // Predicated region
    $region2: #{tpu_custom_call.1} parent=1 // pred_check
      _
    $region3: #{tpu_custom_call.1} parent=1 // pred_check_branch
      %10 = sbr.rel (0) target = $region5
    $region4: #{tpu_custom_call.1} parent=1 // pred_region
      %s12 = ssub.s32 64, 64
      %13 = vsyncadd [#allocation3], %s12
      %s15 = sshll.u32 [#allocation2], 4
      %s16 = int_to_ptr.vmem [resolvable:$true] %s15
      %18 = dma.hbm_to_vmem [thread:$0]  %s0, 64, %s16, [#allocation3]
    $region5: #{tpu_custom_call.1} parent=1 // pred_fallthru
      _
    // Predicated region
    $region6: #{tpu_custom_call.1} parent=1 // pred_check
      _
    $region7: #{tpu_custom_call.1} parent=1 // pred_check_branch
      %20 = sbr.rel (0) target = $region9
    $region8: #{tpu_custom_call.1} parent=1 // pred_region
      _
    $region9: #{tpu_custom_call.1} parent=1 // pred_fallthru
      _
    // Predicated region
    $region10: #{tpu_custom_call.1} parent=1 // pred_check
      _
    $region11: #{tpu_custom_call.1} parent=1 // pred_check_branch
      %22 = sbr.rel (0) target = $region13
    $region12: #{tpu_custom_call.1} parent=1 // pred_region
      %23 = dma.done [#allocation3], 64
    $region13: #{tpu_custom_call.1} parent=1 // pred_fallthru
      _
    %v24 = vld [vmem:[#allocation2] sm:$0xf]
    %v25 = vld [vmem:[%s1] sm:$0x3]
    %v27 = vlaneseq
    %v28 = vshrl.u32 %v27, 7
    %v29 = vsub.s32 0, %v28
    %v30 = vrot.slane %v25, %v29
    %v31 = vlaneseq
    %v32 = vshrl.u32 %v31, 7
    %v33 = vsub.s32 1, %v32
    %v34 = vrot.slane %v25, %v33
    %v35 = vcombine.low %v30, %v34
    %v37 = vunpack.c.l.s4 1983009808
    %v38 = vunpack.c.0.s8 %v37
    %v39 = vlaneseq
    %v40 = vshrl.u32 %v39, 7
    %v41 = vsub.s32 %v38, %v40
    %v42 = vrot.slane %v35, %v41
    %v44 = vadd.f32 %v24, %v42
    %45 = vst [vmem:[#allocation5] sm:$0xf] %v44
    // Predicated region
    $region14: #{tpu_custom_call.1} parent=1 // pred_check
      _
    $region15: #{tpu_custom_call.1} parent=1 // pred_check_branch
      %47 = sbr.rel (0) target = $region17
    $region16: #{tpu_custom_call.1} parent=1 // pred_region
      %s49 = ssub.s32 64, 64
      %50 = vsyncadd [#allocation4], %s49
      %s52 = sshll.u32 [#allocation5], 4
      %s53 = int_to_ptr.vmem [resolvable:$true] %s52
      %55 = dma.vmem_to_hbm [thread:$0]  %s53, 64, %s2, [#allocation4]
    $region17: #{tpu_custom_call.1} parent=1 // pred_fallthru
      _
    // Predicated region
    $region18: #{tpu_custom_call.1} parent=1 // pred_check
      _
    $region19: #{tpu_custom_call.1} parent=1 // pred_check_branch
      %57 = sbr.rel (0) target = $region21
    $region20: #{tpu_custom_call.1} parent=1 // pred_region
      %58 = dma.done [#allocation4], 64
    $region21: #{tpu_custom_call.1} parent=1 // pred_fallthru
      _
    %59 = vsyncpa [#allocation3], 1
    %60 = vsyncpa [#allocation4], 1

</llo_original>
